<compile_context>
chip_gen: v5e
topology: v5e:2x2
jax: 0.10.0
libtpu: 0.0.40
codegen_flags: <defaults>
</compile_context>

<pallas_src>
import jax
import jax.numpy as jnp
from jax.experimental import pallas as pl
from jax.experimental.pallas import tpu as pltpu

EPS = 1e-5
_LANES = 128
_MAX_BLOCK_ROWS = 1024  # 512-1024-row tiles already reach ~85-86% of HBM roofline


def _cdiv(a, b):
    return -(-a // b)


def _round_up(a, b):
    return _cdiv(a, b) * b


def _vmem_budgets():
    """Return (tile_bytes_budget, vmem_limit_bytes), sized per TPU generation."""
    try:
        phys = int(pltpu.get_tpu_info().vmem_capacity_bytes)
    except Exception:
        phys = 64 * 1024 * 1024  # conservative fallback: assume v7x-sized (64 MiB/core) VMEM
    # Scoped limit ~3/4 of physical, capped at 96 MiB: v7x -> 48 MiB, v5e/v6e -> 96 MiB.
    vmem_limit = min(96 * 1024 * 1024, (phys * 3) // 4)
    # Pipeline-buffer budget ~1/3 of the scoped limit; the rest covers the f32 working set
    # and compiler scratch. v7x -> 16 MiB, v5e/v6e -> 32 MiB.
    tile_budget = vmem_limit // 3
    return tile_budget, vmem_limit


def _choose_block_rows(n_rows, width, itemsize, tile_budget):
    """Largest row tile that fits the budget (incl. f32 temporaries) while keeping
    >=2 grid steps (megacore) and >=4 steps for larger problems (pipeline overlap)."""
    if n_rows <= 8:
        return n_rows  # single block; block dim == full array dim is always legal
    # 2 I/O arrays x 2 pipeline buffers at the I/O itemsize + ~3 full-tile f32 temporaries.
    per_row = 4 * width * itemsize + 12 * width
    tm = tile_budget // max(per_row, 1)
    tm = min(tm, _MAX_BLOCK_ROWS)
    target_steps = 4 if n_rows >= 64 else 2
    tm = min(tm, _round_up(_cdiv(n_rows, target_steps), 8))
    tm = min(tm, _round_up(n_rows, 8))
    return max(8, (tm // 8) * 8)


def _layernorm_kernel(x_ref, w_ref, o_ref):
    # x_ref: (tm, H) rows; w_ref: (1, H) scale; o_ref: (tm, H).
    x = x_ref[...].astype(jnp.float32)
    mean = jnp.mean(x, axis=-1, keepdims=True)
    var = jnp.mean(jnp.square(x - mean), axis=-1, keepdims=True)  # biased (PyTorch semantics)
    # Re-derive (x - mean) at the write: x is the only full-size f32 value kept live.
    o_ref[...] = ((x - mean) * jax.lax.rsqrt(var + EPS)
                  * w_ref[...].astype(jnp.float32)).astype(o_ref.dtype)


def _layernorm_packed_kernel(x_ref, w_ref, a_ref, o_ref):
    # Lane-dense small-H variant: each 128-lane physical row holds pack = 128 // H logical
    # rows. a_ref is the (128, 128) block-diagonal averaging matrix (1/H inside each HxH
    # diagonal block), so x @ a gives every lane the mean of its own H-segment.
    x = x_ref[...].astype(jnp.float32)
    a = a_ref[...]
    mean = jnp.dot(x, a, preferred_element_type=jnp.float32,
                   precision=jax.lax.Precision.HIGHEST)
    xc = x - mean
    var = jnp.dot(xc * xc, a, preferred_element_type=jnp.float32,
                  precision=jax.lax.Precision.HIGHEST)            # biased, per segment
    o_ref[...] = (xc * jax.lax.rsqrt(var + EPS)
                  * w_ref[...].astype(jnp.float32)).astype(o_ref.dtype)


def layer_norm(x, weight):
    """LayerNorm over the last dim. x: [..., H], weight: [H]. No bias (matches the module)."""
    orig_shape = x.shape
    H = orig_shape[-1]
    x2 = x.reshape(-1, H)
    M = x2.shape[0]
    itemsize = jnp.dtype(x.dtype).itemsize
    tile_budget, vmem_limit = _vmem_budgets()

    pack = (_LANES // H) if H < _LANES else 0
    use_packed = (H < _LANES) and (_LANES % H == 0) and (pack > 1) and (M % pack == 0)

    if use_packed:
        # Pack `pack` consecutive logical rows into one 128-lane physical row (free reshape).
        P = pack * H                         # == 128: fully lane-dense loads/stores
        Mp = M // pack
        x2p = x2.reshape(Mp, P)
        w_in = jnp.tile(weight, pack).reshape(1, P)
        idx = jnp.arange(P)
        avg = ((idx[:, None] // H) == (idx[None, :] // H)).astype(jnp.float32) * (1.0 / H)

        tm = _choose_block_rows(Mp, P, itemsize, tile_budget)
        grid = (_cdiv(Mp, tm),)
        cost = pl.CostEstimate(
            flops=int(7 * M * H + 4 * Mp * P * P),
            transcendentals=int(M),
            bytes_accessed=int(2 * M * H * itemsize + P * 4 + P * P * 4),
        )
        out = pl.pallas_call(
            _layernorm_packed_kernel,
            out_shape=jax.ShapeDtypeStruct((Mp, P), x.dtype),
            grid_spec=pltpu.PrefetchScalarGridSpec(
                num_scalar_prefetch=0,
                grid=grid,
                in_specs=[
                    pl.BlockSpec((tm, P), lambda i: (i, 0)),
                    pl.BlockSpec((1, P), lambda i: (0, 0)),
                    pl.BlockSpec((P, P), lambda i: (0, 0)),
                ],
                out_specs=pl.BlockSpec((tm, P), lambda i: (i, 0)),
            ),
            compiler_params=pltpu.CompilerParams(
                dimension_semantics=("parallel",),
                vmem_limit_bytes=vmem_limit,
            ),
            cost_estimate=cost,
        )(x2p, w_in, avg)
        return out.reshape(orig_shape)

    # General path: H along the 128-lane axis (fully lane-dense when H % 128 == 0).
    # TODO(synk): H that is neither a multiple nor a divisor of 128 stays lane-sparse; a
    # production variant would pad H to 128 with in-kernel masking of the reduction.
    tm = _choose_block_rows(M, H, itemsize, tile_budget)
    grid = (_cdiv(M, tm),)  # partial last block is masked by Pallas (no concat/slice passes)
    cost = pl.CostEstimate(
        flops=int(7 * M * H),
        transcendentals=int(M),
        bytes_accessed=int(2 * M * H * itemsize + H * 4),
    )
    out = pl.pallas_call(
        _layernorm_kernel,
        out_shape=jax.ShapeDtypeStruct((M, H), x.dtype),
        grid_spec=pltpu.PrefetchScalarGridSpec(
            num_scalar_prefetch=0,
            grid=grid,
            in_specs=[
                pl.BlockSpec((tm, H), lambda i: (i, 0)),
                pl.BlockSpec((1, H), lambda i: (0, 0)),
            ],
            out_specs=pl.BlockSpec((tm, H), lambda i: (i, 0)),
        ),
        compiler_params=pltpu.CompilerParams(
            dimension_semantics=("parallel",),   # shards the row grid across v7x's 2 TCs
            vmem_limit_bytes=vmem_limit,
        ),
        cost_estimate=cost,
    )(x2, weight.reshape(1, H))
    return out.reshape(orig_shape)


def _reference_layer_norm(x, weight):
    xf = x.astype(jnp.float32)
    mean = jnp.mean(xf, axis=-1, keepdims=True)
    var = jnp.mean(jnp.square(xf - mean), axis=-1, keepdims=True)
    return ((xf - mean) * jax.lax.rsqrt(var + EPS)
            * weight.astype(jnp.float32)).astype(x.dtype)


if __name__ == "__main__":
    key = jax.random.PRNGKey(0)

    # Shapes implied by the module's forward: LN over the last dim of a [B, T, H] input.
    B, T, H = 2, 8, 32
    x = jax.random.normal(key, (B, T, H), dtype=jnp.float32)
    weight = jnp.ones((H,), dtype=jnp.float32)   # module init: weight = ones, bias = None

    y = layer_norm(x, weight)                    # H=32 -> lane-dense packed path
    jax.block_until_ready(y)
    y_ref = _reference_layer_norm(x, weight)
    assert y.shape == x.shape and y.dtype == x.dtype
    assert float(jnp.max(jnp.abs(y - y_ref))) < 5e-5

    # Also exercise the general (H multiple of 128) path with a non-trivial weight.
    k1, k2 = jax.random.split(key)
    H2 = 256
    x2 = jax.random.normal(k1, (2, 8, H2), dtype=jnp.float32)
    w2 = 1.0 + 0.1 * jax.random.normal(k2, (H2,), dtype=jnp.float32)
    y2 = layer_norm(x2, w2)
    jax.block_until_ready(y2)
    assert float(jnp.max(jnp.abs(y2 - _reference_layer_norm(x2, w2)))) < 5e-5

    print("KERNEL_OK")
</pallas_src>

<mosaic_0001>
module attributes {stable_mosaic.version = 11 : i64} {
  func.func @_layernorm_packed_kernel(%arg0: i32, %arg1: memref<4x128xf32, #tpu.memory_space<vmem>>, %arg2: memref<1x128xf32, #tpu.memory_space<vmem>>, %arg3: memref<128x128xf32, #tpu.memory_space<vmem>>, %arg4: memref<4x128xf32, #tpu.memory_space<vmem>>) attributes {dimension_semantics = [#tpu.dimension_semantics<parallel>], iteration_bounds = array<i64: 1>, scalar_prefetch = 0 : i64, scratch_operands = 0 : i64, tpu.core_type = #tpu.core_type<tc>, window_params = [{transform_indices = @transform_0, window_bounds = array<i64: 4, 128>}, {pipeline_mode = #tpu.pipeline_mode<synchronous>, transform_indices = @transform_1, window_bounds = array<i64: 1, 128>}, {pipeline_mode = #tpu.pipeline_mode<synchronous>, transform_indices = @transform_2, window_bounds = array<i64: 128, 128>}, {transform_indices = @transform_3, window_bounds = array<i64: 4, 128>}]} {
    %c0 = arith.constant 0 : index
    %c0_0 = arith.constant 0 : index
    %0 = vector.load %arg1[%c0, %c0_0] : memref<4x128xf32, #tpu.memory_space<vmem>>, vector<4x128xf32>
    %c0_1 = arith.constant 0 : index
    %c0_2 = arith.constant 0 : index
    %1 = vector.load %arg3[%c0_1, %c0_2] : memref<128x128xf32, #tpu.memory_space<vmem>>, vector<128x128xf32>
    %cst = arith.constant dense<0.000000e+00> : vector<4x128xf32>
    %2 = tpu.matmul %0, %1, %cst {dimension_numbers = #tpu.dot_dimension_numbers<[1], [0], [0], [1], [0, 0, 1, 1], [], []>, precision = #tpu.contract_precision<fp32>} : vector<4x128xf32>, vector<128x128xf32>, vector<4x128xf32> -> vector<4x128xf32>
    %3 = arith.subf %0, %2 : vector<4x128xf32>
    %4 = arith.mulf %3, %3 : vector<4x128xf32>
    %cst_3 = arith.constant dense<0.000000e+00> : vector<4x128xf32>
    %5 = tpu.matmul %4, %1, %cst_3 {dimension_numbers = #tpu.dot_dimension_numbers<[1], [0], [0], [1], [0, 0, 1, 1], [], []>, precision = #tpu.contract_precision<fp32>} : vector<4x128xf32>, vector<128x128xf32>, vector<4x128xf32> -> vector<4x128xf32>
    %cst_4 = arith.constant 9.99999974E-6 : f32
    %6 = vector.broadcast %cst_4 : f32 to vector<4x128xf32>
    %7 = arith.addf %5, %6 : vector<4x128xf32>
    %8 = math.rsqrt %7 : vector<4x128xf32>
    %9 = arith.mulf %3, %8 : vector<4x128xf32>
    %c0_5 = arith.constant 0 : index
    %c0_6 = arith.constant 0 : index
    %10 = vector.load %arg2[%c0_5, %c0_6] : memref<1x128xf32, #tpu.memory_space<vmem>>, vector<1x128xf32>
    %11 = vector.broadcast %10 : vector<1x128xf32> to vector<4x128xf32>
    %12 = arith.mulf %9, %11 : vector<4x128xf32>
    %c0_7 = arith.constant 0 : index
    %c0_8 = arith.constant 0 : index
    %13 = vector.load %arg4[%c0_7, %c0_8] : memref<4x128xf32, #tpu.memory_space<vmem>>, vector<4x128xf32>
    tpu.vector_store %arg4[%c0_7, %c0_8], %12 {strides = array<i32>} : memref<4x128xf32, #tpu.memory_space<vmem>>, vector<4x128xf32>,
    return
  }
  func.func @transform_0(%arg0: i32) -> (i32, i32) {
    %c0_i32 = arith.constant 0 : i32
    %c0_i32_0 = arith.constant 0 : i32
    return %arg0, %c0_i32 : i32, i32
  }
  func.func @transform_1(%arg0: i32) -> (i32, i32) {
    %c0_i32 = arith.constant 0 : i32
    %c0_i32_0 = arith.constant 0 : i32
    %c0_i32_1 = arith.constant 0 : i32
    return %c0_i32, %c0_i32_0 : i32, i32
  }
  func.func @transform_2(%arg0: i32) -> (i32, i32) {
    %c0_i32 = arith.constant 0 : i32
    %c0_i32_0 = arith.constant 0 : i32
    %c0_i32_1 = arith.constant 0 : i32
    return %c0_i32, %c0_i32_0 : i32, i32
  }
  func.func @transform_3(%arg0: i32) -> (i32, i32) {
    %c0_i32 = arith.constant 0 : i32
    %c0_i32_0 = arith.constant 0 : i32
    return %arg0, %c0_i32 : i32, i32
  }
}

</mosaic_0001>

<llo_original>
// kernel: tpu_custom_call.1
$region0: #{tpu_custom_call.1}
  #allocation0 [shape = 'u32[]', space=smem, size = 0x4, offset = 0x4, fixed_abs, tag = 'smem constant byte address 0x4 - core index']
  #allocation1 [shape = 'u32[72,128]{1,0:T(1,128)}', space=vmem, size = 0x9000, scoped, tag = 'internal scratch']
  %s0 = inlined_call_operand.hbm [shape: f32[4,128], index: 0, kind: input, shape index: {}]
  %s1 = inlined_call_operand.hbm [shape: f32[1,128], index: 1, kind: input, shape index: {}]
  %s2 = inlined_call_operand.hbm [shape: f32[128,128], index: 2, kind: input, shape index: {}]
  %s3 = inlined_call_operand.hbm [shape: f32[4,128], index: 3, kind: output, shape index: {}]
  %s4 = sld [smem:[#allocation0]]
  $region34: #{tpu_custom_call.1} parent=0
    _
  %s6 = ssub.s32 1, %s4
  %s7 = scalar_select 0, %s6, %s4
  $region1: #{tpu_custom_call.1} parent=0
    #allocation2 [shape = 'u8[2048]{0}', space=vmem, size = 0x800, scoped, tag = 'input window, operand 0, single buffered']
    #allocation3 [shape = 's32[1]{0}', space=sflag, size = 0x4, scoped, tag = 'scoped memory for tpu_custom_call.1']
    #allocation4 [shape = 's32[1]{0}', space=sflag, size = 0x4, scoped, tag = 'scoped memory for tpu_custom_call.1']
    #allocation5 [shape = 'u8[512]{0}', space=vmem, size = 0x400, scoped, tag = 'input window, operand 1, single buffered']
    #allocation6 [shape = 's32[1]{0}', space=sflag, size = 0x4, scoped, tag = 'scoped memory for tpu_custom_call.1']
    #allocation7 [shape = 'u8[65536]{0}', space=vmem, size = 0x10000, scoped, tag = 'input window, operand 2, single buffered']
    #allocation8 [shape = 'u8[2048]{0}', space=vmem, size = 0x800, scoped, tag = 'output window, operand 0, single buffered']
    %8 = vsyncpa [#allocation3], 0
    %9 = vsyncpa [#allocation6], 0
    %10 = vsyncpa [#allocation4], 0
    // Predicated region
    $region2: #{tpu_custom_call.1} parent=1 // pred_check
      _
    $region3: #{tpu_custom_call.1} parent=1 // pred_check_branch
      %12 = sbr.rel (0) target = $region5
    $region4: #{tpu_custom_call.1} parent=1 // pred_region
      %14 = vsyncadd [#allocation3], 0
      %s16 = sshll.u32 %s0, 4
      %s17 = int_to_ptr.hbm [resolvable:$true] %s16
      %s18 = sshll.u32 [#allocation2], 4
      %s19 = int_to_ptr.vmem [resolvable:$true] %s18
      %21 = dma.hbm_to_vmem [thread:$0]  %s17, 64, %s19, [#allocation3]
    $region5: #{tpu_custom_call.1} parent=1 // pred_fallthru
      _
    // Predicated region
    $region6: #{tpu_custom_call.1} parent=1 // pred_check
      _
    $region7: #{tpu_custom_call.1} parent=1 // pred_check_branch
      %23 = sbr.rel (0) target = $region9
    $region8: #{tpu_custom_call.1} parent=1 // pred_region
      %25 = vsyncadd [#allocation6], 0
      %s27 = sshll.u32 %s1, 4
      %s28 = int_to_ptr.hbm [resolvable:$true] %s27
      %s29 = sshll.u32 [#allocation5], 4
      %s30 = int_to_ptr.vmem [resolvable:$true] %s29
      %32 = dma.hbm_to_vmem [thread:$0]  %s28, 16, %s30, [#allocation6]
    $region9: #{tpu_custom_call.1} parent=1 // pred_fallthru
      _
    // Predicated region
    $region10: #{tpu_custom_call.1} parent=1 // pred_check
      _
    $region11: #{tpu_custom_call.1} parent=1 // pred_check_branch
      %34 = sbr.rel (0) target = $region13
    $region12: #{tpu_custom_call.1} parent=1 // pred_region
      %36 = vsyncadd [#allocation6], 0
      %s37 = sshll.u32 %s2, 4
      %s38 = int_to_ptr.hbm [resolvable:$true] %s37
      %s39 = sshll.u32 [#allocation7], 4
      %s40 = int_to_ptr.vmem [resolvable:$true] %s39
      %45 = dma.hbm_to_vmem [thread:$0]  %s38, 2048, %s40, [#allocation6], 128, 128, 8
    $region13: #{tpu_custom_call.1} parent=1 // pred_fallthru
      _
    // Predicated region
    $region14: #{tpu_custom_call.1} parent=1 // pred_check
      _
    $region15: #{tpu_custom_call.1} parent=1 // pred_check_branch
      %47 = sbr.rel (0) target = $region17
    $region16: #{tpu_custom_call.1} parent=1 // pred_region
      %49 = dma.done [#allocation3], 64
    $region17: #{tpu_custom_call.1} parent=1 // pred_fallthru
      _
    // Predicated region
    $region18: #{tpu_custom_call.1} parent=1 // pred_check
      _
    $region19: #{tpu_custom_call.1} parent=1 // pred_check_branch
      %51 = sbr.rel (0) target = $region21
    $region20: #{tpu_custom_call.1} parent=1 // pred_region
      %53 = dma.done [#allocation6], 16
    $region21: #{tpu_custom_call.1} parent=1 // pred_fallthru
      _
    // Predicated region
    $region22: #{tpu_custom_call.1} parent=1 // pred_check
      _
    $region23: #{tpu_custom_call.1} parent=1 // pred_check_branch
      %55 = sbr.rel (0) target = $region25
    $region24: #{tpu_custom_call.1} parent=1 // pred_region
      %57 = dma.done [#allocation6], 2048
    $region25: #{tpu_custom_call.1} parent=1 // pred_fallthru
      _
    %v58 = vld [vmem:[#allocation2] sm:$0xf]
    %v59 = vld [vmem:[#allocation7] sm:$0xff]
    %v60 = vld [vmem:[#allocation7 + $0x8] sm:$0xff]
    %v61 = vld [vmem:[#allocation7 + $0x10] sm:$0xff]
    %v62 = vld [vmem:[#allocation7 + $0x18] sm:$0xff]
    %v63 = vld [vmem:[#allocation7 + $0x20] sm:$0xff]
    %v64 = vld [vmem:[#allocation7 + $0x28] sm:$0xff]
    %v65 = vld [vmem:[#allocation7 + $0x30] sm:$0xff]
    %v66 = vld [vmem:[#allocation7 + $0x38] sm:$0xff]
    %v67 = vld [vmem:[#allocation7 + $0x40] sm:$0xff]
    %v68 = vld [vmem:[#allocation7 + $0x48] sm:$0xff]
    %v69 = vld [vmem:[#allocation7 + $0x50] sm:$0xff]
    %v70 = vld [vmem:[#allocation7 + $0x58] sm:$0xff]
    %v71 = vld [vmem:[#allocation7 + $0x60] sm:$0xff]
    %v72 = vld [vmem:[#allocation7 + $0x68] sm:$0xff]
    %v73 = vld [vmem:[#allocation7 + $0x70] sm:$0xff]
    %v74 = vld [vmem:[#allocation7 + $0x78] sm:$0xff]
    %v75 = vand.u32 %v74, 4294901760
    %76 = vmatpush.msra.mxu0 %v75
    %v77 = vand.u32 %v73, 4294901760
    %78 = vmatpush.msra.mxu0 %v77
    %v79 = vand.u32 %v72, 4294901760
    %80 = vmatpush.msra.mxu0 %v79
    %v81 = vand.u32 %v71, 4294901760
    %82 = vmatpush.msra.mxu0 %v81
    %v83 = vand.u32 %v70, 4294901760
    %84 = vmatpush.msra.mxu0 %v83
    %v85 = vand.u32 %v69, 4294901760
    %86 = vmatpush.msra.mxu0 %v85
    %v87 = vand.u32 %v68, 4294901760
    %88 = vmatpush.msra.mxu0 %v87
    %v89 = vand.u32 %v67, 4294901760
    %90 = vmatpush.msra.mxu0 %v89
    %v91 = vand.u32 %v66, 4294901760
    %92 = vmatpush.msra.mxu0 %v91
    %v93 = vand.u32 %v65, 4294901760
    %94 = vmatpush.msra.mxu0 %v93
    %v95 = vand.u32 %v64, 4294901760
    %96 = vmatpush.msra.mxu0 %v95
    %v97 = vand.u32 %v63, 4294901760
    %98 = vmatpush.msra.mxu0 %v97
    %v99 = vand.u32 %v62, 4294901760
    %100 = vmatpush.msra.mxu0 %v99
    %v101 = vand.u32 %v61, 4294901760
    %102 = vmatpush.msra.mxu0 %v101
    %v103 = vand.u32 %v60, 4294901760
    %104 = vmatpush.msra.mxu0 %v103
    %v105 = vand.u32 %v59, 4294901760
    %106 = vmatpush.msra.mxu0 %v105
    %v107 = vand.u32 %v58, 4294901760
    %v108 = vsub.f32 %v58, %v107
    %v109 = vand.u32 %v108, 4294901760
    %v110 = vsub.f32 %v108, %v109
    %v111 = vand.u32 %v110, 4294901760
    %112 = vmatmul.f32.gmra.mxu0 %v111
    %v113 = vpop.f32.mrf.mxu0
    %v114 = vadd.f32 0.0, %v113
    %115 = vdwg.mxu0
    %v116 = vand.u32 %v74, 4294901760
    %v117 = vsub.f32 %v74, %v116
    %v118 = vand.u32 %v117, 4294901760
    %v119 = vsub.f32 %v117, %v118
    %v120 = vand.u32 %v119, 4294901760
    %121 = vmatpush.msra.mxu0 %v120
    %v122 = vand.u32 %v73, 4294901760
    %v123 = vsub.f32 %v73, %v122
    %v124 = vand.u32 %v123, 4294901760
    %v125 = vsub.f32 %v123, %v124
    %v126 = vand.u32 %v125, 4294901760
    %127 = vmatpush.msra.mxu0 %v126
    %v128 = vand.u32 %v72, 4294901760
    %v129 = vsub.f32 %v72, %v128
    %v130 = vand.u32 %v129, 4294901760
    %v131 = vsub.f32 %v129, %v130
    %v132 = vand.u32 %v131, 4294901760
    %133 = vmatpush.msra.mxu0 %v132
    %v134 = vand.u32 %v71, 4294901760
    %v135 = vsub.f32 %v71, %v134
    %v136 = vand.u32 %v135, 4294901760
    %v137 = vsub.f32 %v135, %v136
    %v138 = vand.u32 %v137, 4294901760
    %139 = vmatpush.msra.mxu0 %v138
    %v140 = vand.u32 %v70, 4294901760
    %v141 = vsub.f32 %v70, %v140
    %v142 = vand.u32 %v141, 4294901760
    %v143 = vsub.f32 %v141, %v142
    %v144 = vand.u32 %v143, 4294901760
    %145 = vmatpush.msra.mxu0 %v144
    %v146 = vand.u32 %v69, 4294901760
    %v147 = vsub.f32 %v69, %v146
    %v148 = vand.u32 %v147, 4294901760
    %v149 = vsub.f32 %v147, %v148
    %v150 = vand.u32 %v149, 4294901760
    %151 = vmatpush.msra.mxu0 %v150
    %v152 = vand.u32 %v68, 4294901760
    %v153 = vsub.f32 %v68, %v152
    %v154 = vand.u32 %v153, 4294901760
    %v155 = vsub.f32 %v153, %v154
    %v156 = vand.u32 %v155, 4294901760
    %157 = vmatpush.msra.mxu0 %v156
    %v158 = vand.u32 %v67, 4294901760
    %v159 = vsub.f32 %v67, %v158
    %v160 = vand.u32 %v159, 4294901760
    %v161 = vsub.f32 %v159, %v160
    %v162 = vand.u32 %v161, 4294901760
    %163 = vmatpush.msra.mxu0 %v162
    %v164 = vand.u32 %v66, 4294901760
    %v165 = vsub.f32 %v66, %v164
    %v166 = vand.u32 %v165, 4294901760
    %v167 = vsub.f32 %v165, %v166
    %v168 = vand.u32 %v167, 4294901760
    %169 = vmatpush.msra.mxu0 %v168
    %v170 = vand.u32 %v65, 4294901760
    %v171 = vsub.f32 %v65, %v170
    %v172 = vand.u32 %v171, 4294901760
    %v173 = vsub.f32 %v171, %v172
    %v174 = vand.u32 %v173, 4294901760
    %175 = vmatpush.msra.mxu0 %v174
    %v176 = vand.u32 %v64, 4294901760
    %v177 = vsub.f32 %v64, %v176
    %v178 = vand.u32 %v177, 4294901760
    %v179 = vsub.f32 %v177, %v178
    %v180 = vand.u32 %v179, 4294901760
    %181 = vmatpush.msra.mxu0 %v180
    %v182 = vand.u32 %v63, 4294901760
    %v183 = vsub.f32 %v63, %v182
    %v184 = vand.u32 %v183, 4294901760
    %v185 = vsub.f32 %v183, %v184
    %v186 = vand.u32 %v185, 4294901760
    %187 = vmatpush.msra.mxu0 %v186
    %v188 = vand.u32 %v62, 4294901760
    %v189 = vsub.f32 %v62, %v188
    %v190 = vand.u32 %v189, 4294901760
    %v191 = vsub.f32 %v189, %v190
    %v192 = vand.u32 %v191, 4294901760
    %193 = vmatpush.msra.mxu0 %v192
    %v194 = vand.u32 %v61, 4294901760
    %v195 = vsub.f32 %v61, %v194
    %v196 = vand.u32 %v195, 4294901760
    %v197 = vsub.f32 %v195, %v196
    %v198 = vand.u32 %v197, 4294901760
    %199 = vmatpush.msra.mxu0 %v198
    %v200 = vand.u32 %v60, 4294901760
    %v201 = vsub.f32 %v60, %v200
    %v202 = vand.u32 %v201, 4294901760
    %v203 = vsub.f32 %v201, %v202
    %v204 = vand.u32 %v203, 4294901760
    %205 = vmatpush.msra.mxu0 %v204
    %v206 = vand.u32 %v59, 4294901760
    %v207 = vsub.f32 %v59, %v206
    %v208 = vand.u32 %v207, 4294901760
    %v209 = vsub.f32 %v207, %v208
    %v210 = vand.u32 %v209, 4294901760
    %211 = vmatpush.msra.mxu0 %v210
    %v212 = vand.u32 %v58, 4294901760
    %213 = vmatmul.f32.gmra.mxu0 %v212
    %v214 = vpop.f32.mrf.mxu0
    %v215 = vadd.f32 %v114, %v214
    %216 = vdwg.mxu0
    %v217 = vand.u32 %v74, 4294901760
    %v218 = vsub.f32 %v74, %v217
    %219 = vmatpush.msra.mxu0 %v218
    %v220 = vand.u32 %v73, 4294901760
    %v221 = vsub.f32 %v73, %v220
    %222 = vmatpush.msra.mxu0 %v221
    %v223 = vand.u32 %v72, 4294901760
    %v224 = vsub.f32 %v72, %v223
    %225 = vmatpush.msra.mxu0 %v224
    %v226 = vand.u32 %v71, 4294901760
    %v227 = vsub.f32 %v71, %v226
    %228 = vmatpush.msra.mxu0 %v227
    %v229 = vand.u32 %v70, 4294901760
    %v230 = vsub.f32 %v70, %v229
    %231 = vmatpush.msra.mxu0 %v230
    %v232 = vand.u32 %v69, 4294901760
    %v233 = vsub.f32 %v69, %v232
    %234 = vmatpush.msra.mxu0 %v233
    %v235 = vand.u32 %v68, 4294901760
    %v236 = vsub.f32 %v68, %v235
    %237 = vmatpush.msra.mxu0 %v236
    %v238 = vand.u32 %v67, 4294901760
    %v239 = vsub.f32 %v67, %v238
    %240 = vmatpush.msra.mxu0 %v239
    %v241 = vand.u32 %v66, 4294901760
    %v242 = vsub.f32 %v66, %v241
    %243 = vmatpush.msra.mxu0 %v242
    %v244 = vand.u32 %v65, 4294901760
    %v245 = vsub.f32 %v65, %v244
    %246 = vmatpush.msra.mxu0 %v245
    %v247 = vand.u32 %v64, 4294901760
    %v248 = vsub.f32 %v64, %v247
    %249 = vmatpush.msra.mxu0 %v248
    %v250 = vand.u32 %v63, 4294901760
    %v251 = vsub.f32 %v63, %v250
    %252 = vmatpush.msra.mxu0 %v251
    %v253 = vand.u32 %v62, 4294901760
    %v254 = vsub.f32 %v62, %v253
    %255 = vmatpush.msra.mxu0 %v254
    %v256 = vand.u32 %v61, 4294901760
    %v257 = vsub.f32 %v61, %v256
    %258 = vmatpush.msra.mxu0 %v257
    %v259 = vand.u32 %v60, 4294901760
    %v260 = vsub.f32 %v60, %v259
    %261 = vmatpush.msra.mxu0 %v260
    %v262 = vand.u32 %v59, 4294901760
    %v263 = vsub.f32 %v59, %v262
    %264 = vmatpush.msra.mxu0 %v263
    %v265 = vand.u32 %v58, 4294901760
    %v266 = vsub.f32 %v58, %v265
    %267 = vmatmul.f32.gmra.mxu0 %v266
    %v268 = vpop.f32.mrf.mxu0
    %v269 = vadd.f32 %v215, %v268
    %270 = vdwg.mxu0
    %v271 = vand.u32 %v74, 4294901760
    %272 = vmatpush.msra.mxu0 %v271
    %v273 = vand.u32 %v73, 4294901760
    %274 = vmatpush.msra.mxu0 %v273
    %v275 = vand.u32 %v72, 4294901760
    %276 = vmatpush.msra.mxu0 %v275
    %v277 = vand.u32 %v71, 4294901760
    %278 = vmatpush.msra.mxu0 %v277
    %v279 = vand.u32 %v70, 4294901760
    %280 = vmatpush.msra.mxu0 %v279
    %v281 = vand.u32 %v69, 4294901760
    %282 = vmatpush.msra.mxu0 %v281
    %v283 = vand.u32 %v68, 4294901760
    %284 = vmatpush.msra.mxu0 %v283
    %v285 = vand.u32 %v67, 4294901760
    %286 = vmatpush.msra.mxu0 %v285
    %v287 = vand.u32 %v66, 4294901760
    %288 = vmatpush.msra.mxu0 %v287
    %v289 = vand.u32 %v65, 4294901760
    %290 = vmatpush.msra.mxu0 %v289
    %v291 = vand.u32 %v64, 4294901760
    %292 = vmatpush.msra.mxu0 %v291
    %v293 = vand.u32 %v63, 4294901760
    %294 = vmatpush.msra.mxu0 %v293
    %v295 = vand.u32 %v62, 4294901760
    %296 = vmatpush.msra.mxu0 %v295
    %v297 = vand.u32 %v61, 4294901760
    %298 = vmatpush.msra.mxu0 %v297
    %v299 = vand.u32 %v60, 4294901760
    %300 = vmatpush.msra.mxu0 %v299
    %v301 = vand.u32 %v59, 4294901760
    %302 = vmatpush.msra.mxu0 %v301
    %v303 = vand.u32 %v58, 4294901760
    %v304 = vsub.f32 %v58, %v303
    %v305 = vand.u32 %v304, 4294901760
    %306 = vmatmul.f32.gmra.mxu0 %v305
    %v307 = vpop.f32.mrf.mxu0
    %v308 = vadd.f32 %v269, %v307
    %309 = vdwg.mxu0
    %v310 = vand.u32 %v74, 4294901760
    %v311 = vsub.f32 %v74, %v310
    %v312 = vand.u32 %v311, 4294901760
    %313 = vmatpush.msra.mxu0 %v312
    %v314 = vand.u32 %v73, 4294901760
    %v315 = vsub.f32 %v73, %v314
    %v316 = vand.u32 %v315, 4294901760
    %317 = vmatpush.msra.mxu0 %v316
    %v318 = vand.u32 %v72, 4294901760
    %v319 = vsub.f32 %v72, %v318
    %v320 = vand.u32 %v319, 4294901760
    %321 = vmatpush.msra.mxu0 %v320
    %v322 = vand.u32 %v71, 4294901760
    %v323 = vsub.f32 %v71, %v322
    %v324 = vand.u32 %v323, 4294901760
    %325 = vmatpush.msra.mxu0 %v324
    %v326 = vand.u32 %v70, 4294901760
    %v327 = vsub.f32 %v70, %v326
    %v328 = vand.u32 %v327, 4294901760
    %329 = vmatpush.msra.mxu0 %v328
    %v330 = vand.u32 %v69, 4294901760
    %v331 = vsub.f32 %v69, %v330
    %v332 = vand.u32 %v331, 4294901760
    %333 = vmatpush.msra.mxu0 %v332
    %v334 = vand.u32 %v68, 4294901760
    %v335 = vsub.f32 %v68, %v334
    %v336 = vand.u32 %v335, 4294901760
    %337 = vmatpush.msra.mxu0 %v336
    %v338 = vand.u32 %v67, 4294901760
    %v339 = vsub.f32 %v67, %v338
    %v340 = vand.u32 %v339, 4294901760
    %341 = vmatpush.msra.mxu0 %v340
    %v342 = vand.u32 %v66, 4294901760
    %v343 = vsub.f32 %v66, %v342
    %v344 = vand.u32 %v343, 4294901760
    %345 = vmatpush.msra.mxu0 %v344
    %v346 = vand.u32 %v65, 4294901760
    %v347 = vsub.f32 %v65, %v346
    %v348 = vand.u32 %v347, 4294901760
    %349 = vmatpush.msra.mxu0 %v348
    %v350 = vand.u32 %v64, 4294901760
    %v351 = vsub.f32 %v64, %v350
    %v352 = vand.u32 %v351, 4294901760
    %353 = vmatpush.msra.mxu0 %v352
    %v354 = vand.u32 %v63, 4294901760
    %v355 = vsub.f32 %v63, %v354
    %v356 = vand.u32 %v355, 4294901760
    %357 = vmatpush.msra.mxu0 %v356
    %v358 = vand.u32 %v62, 4294901760
    %v359 = vsub.f32 %v62, %v358
    %v360 = vand.u32 %v359, 4294901760
    %361 = vmatpush.msra.mxu0 %v360
    %v362 = vand.u32 %v61, 4294901760
    %v363 = vsub.f32 %v61, %v362
    %v364 = vand.u32 %v363, 4294901760
    %365 = vmatpush.msra.mxu0 %v364
    %v366 = vand.u32 %v60, 4294901760
    %v367 = vsub.f32 %v60, %v366
    %v368 = vand.u32 %v367, 4294901760
    %369 = vmatpush.msra.mxu0 %v368
    %v370 = vand.u32 %v59, 4294901760
    %v371 = vsub.f32 %v59, %v370
    %v372 = vand.u32 %v371, 4294901760
    %373 = vmatpush.msra.mxu0 %v372
    %v374 = vand.u32 %v58, 4294901760
    %375 = vmatmul.f32.gmra.mxu0 %v374
    %v376 = vpop.f32.mrf.mxu0
    %v377 = vadd.f32 %v308, %v376
    %378 = vdwg.mxu0
    %v379 = vand.u32 %v74, 4294901760
    %380 = vmatpush.msra.mxu0 %v379
    %v381 = vand.u32 %v73, 4294901760
    %382 = vmatpush.msra.mxu0 %v381
    %v383 = vand.u32 %v72, 4294901760
    %384 = vmatpush.msra.mxu0 %v383
    %v385 = vand.u32 %v71, 4294901760
    %386 = vmatpush.msra.mxu0 %v385
    %v387 = vand.u32 %v70, 4294901760
    %388 = vmatpush.msra.mxu0 %v387
    %v389 = vand.u32 %v69, 4294901760
    %390 = vmatpush.msra.mxu0 %v389
    %v391 = vand.u32 %v68, 4294901760
    %392 = vmatpush.msra.mxu0 %v391
    %v393 = vand.u32 %v67, 4294901760
    %394 = vmatpush.msra.mxu0 %v393
    %v395 = vand.u32 %v66, 4294901760
    %396 = vmatpush.msra.mxu0 %v395
    %v397 = vand.u32 %v65, 4294901760
    %398 = vmatpush.msra.mxu0 %v397
    %v399 = vand.u32 %v64, 4294901760
    %400 = vmatpush.msra.mxu0 %v399
    %v401 = vand.u32 %v63, 4294901760
    %402 = vmatpush.msra.mxu0 %v401
    %v403 = vand.u32 %v62, 4294901760
    %404 = vmatpush.msra.mxu0 %v403
    %v405 = vand.u32 %v61, 4294901760
    %406 = vmatpush.msra.mxu0 %v405
    %v407 = vand.u32 %v60, 4294901760
    %408 = vmatpush.msra.mxu0 %v407
    %v409 = vand.u32 %v59, 4294901760
    %410 = vmatpush.msra.mxu0 %v409
    %v411 = vand.u32 %v58, 4294901760
    %412 = vmatmul.f32.gmra.mxu0 %v411
    %v413 = vpop.f32.mrf.mxu0
    %v414 = vadd.f32 %v377, %v413
    %415 = vdwg.mxu0
    %v416 = vsub.f32 %v58, %v414
    %v417 = vmul.f32 %v416, %v416
    %v418 = vand.u32 %v74, 4294901760
    %419 = vmatpush.msra.mxu0 %v418
    %v420 = vand.u32 %v73, 4294901760
    %421 = vmatpush.msra.mxu0 %v420
    %v422 = vand.u32 %v72, 4294901760
    %423 = vmatpush.msra.mxu0 %v422
    %v424 = vand.u32 %v71, 4294901760
    %425 = vmatpush.msra.mxu0 %v424
    %v426 = vand.u32 %v70, 4294901760
    %427 = vmatpush.msra.mxu0 %v426
    %v428 = vand.u32 %v69, 4294901760
    %429 = vmatpush.msra.mxu0 %v428
    %v430 = vand.u32 %v68, 4294901760
    %431 = vmatpush.msra.mxu0 %v430
    %v432 = vand.u32 %v67, 4294901760
    %433 = vmatpush.msra.mxu0 %v432
    %v434 = vand.u32 %v66, 4294901760
    %435 = vmatpush.msra.mxu0 %v434
    %v436 = vand.u32 %v65, 4294901760
    %437 = vmatpush.msra.mxu0 %v436
    %v438 = vand.u32 %v64, 4294901760
    %439 = vmatpush.msra.mxu0 %v438
    %v440 = vand.u32 %v63, 4294901760
    %441 = vmatpush.msra.mxu0 %v440
    %v442 = vand.u32 %v62, 4294901760
    %443 = vmatpush.msra.mxu0 %v442
    %v444 = vand.u32 %v61, 4294901760
    %445 = vmatpush.msra.mxu0 %v444
    %v446 = vand.u32 %v60, 4294901760
    %447 = vmatpush.msra.mxu0 %v446
    %v448 = vand.u32 %v59, 4294901760
    %449 = vmatpush.msra.mxu0 %v448
    %v450 = vand.u32 %v417, 4294901760
    %v451 = vsub.f32 %v417, %v450
    %v452 = vand.u32 %v451, 4294901760
    %v453 = vsub.f32 %v451, %v452
    %v454 = vand.u32 %v453, 4294901760
    %455 = vmatmul.f32.gmra.mxu0 %v454
    %v456 = vpop.f32.mrf.mxu0
    %v457 = vadd.f32 1e-05, %v456
    %458 = vdwg.mxu0
    %v459 = vand.u32 %v74, 4294901760
    %v460 = vsub.f32 %v74, %v459
    %v461 = vand.u32 %v460, 4294901760
    %v462 = vsub.f32 %v460, %v461
    %v463 = vand.u32 %v462, 4294901760
    %464 = vmatpush.msra.mxu0 %v463
    %v465 = vand.u32 %v73, 4294901760
    %v466 = vsub.f32 %v73, %v465
    %v467 = vand.u32 %v466, 4294901760
    %v468 = vsub.f32 %v466, %v467
    %v469 = vand.u32 %v468, 4294901760
    %470 = vmatpush.msra.mxu0 %v469
    %v471 = vand.u32 %v72, 4294901760
    %v472 = vsub.f32 %v72, %v471
    %v473 = vand.u32 %v472, 4294901760
    %v474 = vsub.f32 %v472, %v473
    %v475 = vand.u32 %v474, 4294901760
    %476 = vmatpush.msra.mxu0 %v475
    %v477 = vand.u32 %v71, 4294901760
    %v478 = vsub.f32 %v71, %v477
    %v479 = vand.u32 %v478, 4294901760
    %v480 = vsub.f32 %v478, %v479
    %v481 = vand.u32 %v480, 4294901760
    %482 = vmatpush.msra.mxu0 %v481
    %v483 = vand.u32 %v70, 4294901760
    %v484 = vsub.f32 %v70, %v483
    %v485 = vand.u32 %v484, 4294901760
    %v486 = vsub.f32 %v484, %v485
    %v487 = vand.u32 %v486, 4294901760
    %488 = vmatpush.msra.mxu0 %v487
    %v489 = vand.u32 %v69, 4294901760
    %v490 = vsub.f32 %v69, %v489
    %v491 = vand.u32 %v490, 4294901760
    %v492 = vsub.f32 %v490, %v491
    %v493 = vand.u32 %v492, 4294901760
    %494 = vmatpush.msra.mxu0 %v493
    %v495 = vand.u32 %v68, 4294901760
    %v496 = vsub.f32 %v68, %v495
    %v497 = vand.u32 %v496, 4294901760
    %v498 = vsub.f32 %v496, %v497
    %v499 = vand.u32 %v498, 4294901760
    %500 = vmatpush.msra.mxu0 %v499
    %v501 = vand.u32 %v67, 4294901760
    %v502 = vsub.f32 %v67, %v501
    %v503 = vand.u32 %v502, 4294901760
    %v504 = vsub.f32 %v502, %v503
    %v505 = vand.u32 %v504, 4294901760
    %506 = vmatpush.msra.mxu0 %v505
    %v507 = vand.u32 %v66, 4294901760
    %v508 = vsub.f32 %v66, %v507
    %v509 = vand.u32 %v508, 4294901760
    %v510 = vsub.f32 %v508, %v509
    %v511 = vand.u32 %v510, 4294901760
    %512 = vmatpush.msra.mxu0 %v511
    %v513 = vand.u32 %v65, 4294901760
    %v514 = vsub.f32 %v65, %v513
    %v515 = vand.u32 %v514, 4294901760
    %v516 = vsub.f32 %v514, %v515
    %v517 = vand.u32 %v516, 4294901760
    %518 = vmatpush.msra.mxu0 %v517
    %v519 = vand.u32 %v64, 4294901760
    %v520 = vsub.f32 %v64, %v519
    %v521 = vand.u32 %v520, 4294901760
    %v522 = vsub.f32 %v520, %v521
    %v523 = vand.u32 %v522, 4294901760
    %524 = vmatpush.msra.mxu0 %v523
    %v525 = vand.u32 %v63, 4294901760
    %v526 = vsub.f32 %v63, %v525
    %v527 = vand.u32 %v526, 4294901760
    %v528 = vsub.f32 %v526, %v527
    %v529 = vand.u32 %v528, 4294901760
    %530 = vmatpush.msra.mxu0 %v529
    %v531 = vand.u32 %v62, 4294901760
    %v532 = vsub.f32 %v62, %v531
    %v533 = vand.u32 %v532, 4294901760
    %v534 = vsub.f32 %v532, %v533
    %v535 = vand.u32 %v534, 4294901760
    %536 = vmatpush.msra.mxu0 %v535
    %v537 = vand.u32 %v61, 4294901760
    %v538 = vsub.f32 %v61, %v537
    %v539 = vand.u32 %v538, 4294901760
    %v540 = vsub.f32 %v538, %v539
    %v541 = vand.u32 %v540, 4294901760
    %542 = vmatpush.msra.mxu0 %v541
    %v543 = vand.u32 %v60, 4294901760
    %v544 = vsub.f32 %v60, %v543
    %v545 = vand.u32 %v544, 4294901760
    %v546 = vsub.f32 %v544, %v545
    %v547 = vand.u32 %v546, 4294901760
    %548 = vmatpush.msra.mxu0 %v547
    %v549 = vand.u32 %v59, 4294901760
    %v550 = vsub.f32 %v59, %v549
    %v551 = vand.u32 %v550, 4294901760
    %v552 = vsub.f32 %v550, %v551
    %v553 = vand.u32 %v552, 4294901760
    %554 = vmatpush.msra.mxu0 %v553
    %v555 = vand.u32 %v417, 4294901760
    %556 = vmatmul.f32.gmra.mxu0 %v555
    %v557 = vpop.f32.mrf.mxu0
    %v558 = vadd.f32 %v457, %v557
    %559 = vdwg.mxu0
    %v560 = vand.u32 %v74, 4294901760
    %v561 = vsub.f32 %v74, %v560
    %562 = vmatpush.msra.mxu0 %v561
    %v563 = vand.u32 %v73, 4294901760
    %v564 = vsub.f32 %v73, %v563
    %565 = vmatpush.msra.mxu0 %v564
    %v566 = vand.u32 %v72, 4294901760
    %v567 = vsub.f32 %v72, %v566
    %568 = vmatpush.msra.mxu0 %v567
    %v569 = vand.u32 %v71, 4294901760
    %v570 = vsub.f32 %v71, %v569
    %571 = vmatpush.msra.mxu0 %v570
    %v572 = vand.u32 %v70, 4294901760
    %v573 = vsub.f32 %v70, %v572
    %574 = vmatpush.msra.mxu0 %v573
    %v575 = vand.u32 %v69, 4294901760
    %v576 = vsub.f32 %v69, %v575
    %577 = vmatpush.msra.mxu0 %v576
    %v578 = vand.u32 %v68, 4294901760
    %v579 = vsub.f32 %v68, %v578
    %580 = vmatpush.msra.mxu0 %v579
    %v581 = vand.u32 %v67, 4294901760
    %v582 = vsub.f32 %v67, %v581
    %583 = vmatpush.msra.mxu0 %v582
    %v584 = vand.u32 %v66, 4294901760
    %v585 = vsub.f32 %v66, %v584
    %586 = vmatpush.msra.mxu0 %v585
    %v587 = vand.u32 %v65, 4294901760
    %v588 = vsub.f32 %v65, %v587
    %589 = vmatpush.msra.mxu0 %v588
    %v590 = vand.u32 %v64, 4294901760
    %v591 = vsub.f32 %v64, %v590
    %592 = vmatpush.msra.mxu0 %v591
    %v593 = vand.u32 %v63, 4294901760
    %v594 = vsub.f32 %v63, %v593
    %595 = vmatpush.msra.mxu0 %v594
    %v596 = vand.u32 %v62, 4294901760
    %v597 = vsub.f32 %v62, %v596
    %598 = vmatpush.msra.mxu0 %v597
    %v599 = vand.u32 %v61, 4294901760
    %v600 = vsub.f32 %v61, %v599
    %601 = vmatpush.msra.mxu0 %v600
    %v602 = vand.u32 %v60, 4294901760
    %v603 = vsub.f32 %v60, %v602
    %604 = vmatpush.msra.mxu0 %v603
    %v605 = vand.u32 %v59, 4294901760
    %v606 = vsub.f32 %v59, %v605
    %607 = vmatpush.msra.mxu0 %v606
    %v608 = vand.u32 %v417, 4294901760
    %v609 = vsub.f32 %v417, %v608
    %610 = vmatmul.f32.gmra.mxu0 %v609
    %v611 = vpop.f32.mrf.mxu0
    %v612 = vadd.f32 %v558, %v611
    %613 = vdwg.mxu0
    %v614 = vand.u32 %v74, 4294901760
    %615 = vmatpush.msra.mxu0 %v614
    %v616 = vand.u32 %v73, 4294901760
    %617 = vmatpush.msra.mxu0 %v616
    %v618 = vand.u32 %v72, 4294901760
    %619 = vmatpush.msra.mxu0 %v618
    %v620 = vand.u32 %v71, 4294901760
    %621 = vmatpush.msra.mxu0 %v620
    %v622 = vand.u32 %v70, 4294901760
    %623 = vmatpush.msra.mxu0 %v622
    %v624 = vand.u32 %v69, 4294901760
    %625 = vmatpush.msra.mxu0 %v624
    %v626 = vand.u32 %v68, 4294901760
    %627 = vmatpush.msra.mxu0 %v626
    %v628 = vand.u32 %v67, 4294901760
    %629 = vmatpush.msra.mxu0 %v628
    %v630 = vand.u32 %v66, 4294901760
    %631 = vmatpush.msra.mxu0 %v630
    %v632 = vand.u32 %v65, 4294901760
    %633 = vmatpush.msra.mxu0 %v632
    %v634 = vand.u32 %v64, 4294901760
    %635 = vmatpush.msra.mxu0 %v634
    %v636 = vand.u32 %v63, 4294901760
    %637 = vmatpush.msra.mxu0 %v636
    %v638 = vand.u32 %v62, 4294901760
    %639 = vmatpush.msra.mxu0 %v638
    %v640 = vand.u32 %v61, 4294901760
    %641 = vmatpush.msra.mxu0 %v640
    %v642 = vand.u32 %v60, 4294901760
    %643 = vmatpush.msra.mxu0 %v642
    %v644 = vand.u32 %v59, 4294901760
    %645 = vmatpush.msra.mxu0 %v644
    %v646 = vand.u32 %v417, 4294901760
    %v647 = vsub.f32 %v417, %v646
    %v648 = vand.u32 %v647, 4294901760
    %649 = vmatmul.f32.gmra.mxu0 %v648
    %v650 = vpop.f32.mrf.mxu0
    %v651 = vadd.f32 %v612, %v650
    %652 = vdwg.mxu0
    %v653 = vand.u32 %v74, 4294901760
    %v654 = vsub.f32 %v74, %v653
    %v655 = vand.u32 %v654, 4294901760
    %656 = vmatpush.msra.mxu0 %v655
    %v657 = vand.u32 %v73, 4294901760
    %v658 = vsub.f32 %v73, %v657
    %v659 = vand.u32 %v658, 4294901760
    %660 = vmatpush.msra.mxu0 %v659
    %v661 = vand.u32 %v72, 4294901760
    %v662 = vsub.f32 %v72, %v661
    %v663 = vand.u32 %v662, 4294901760
    %664 = vmatpush.msra.mxu0 %v663
    %v665 = vand.u32 %v71, 4294901760
    %v666 = vsub.f32 %v71, %v665
    %v667 = vand.u32 %v666, 4294901760
    %668 = vmatpush.msra.mxu0 %v667
    %v669 = vand.u32 %v70, 4294901760
    %v670 = vsub.f32 %v70, %v669
    %v671 = vand.u32 %v670, 4294901760
    %672 = vmatpush.msra.mxu0 %v671
    %v673 = vand.u32 %v69, 4294901760
    %v674 = vsub.f32 %v69, %v673
    %v675 = vand.u32 %v674, 4294901760
    %676 = vmatpush.msra.mxu0 %v675
    %v677 = vand.u32 %v68, 4294901760
    %v678 = vsub.f32 %v68, %v677
    %v679 = vand.u32 %v678, 4294901760
    %680 = vmatpush.msra.mxu0 %v679
    %v681 = vand.u32 %v67, 4294901760
    %v682 = vsub.f32 %v67, %v681
    %v683 = vand.u32 %v682, 4294901760
    %684 = vmatpush.msra.mxu0 %v683
    %v685 = vand.u32 %v66, 4294901760
    %v686 = vsub.f32 %v66, %v685
    %v687 = vand.u32 %v686, 4294901760
    %688 = vmatpush.msra.mxu0 %v687
    %v689 = vand.u32 %v65, 4294901760
    %v690 = vsub.f32 %v65, %v689
    %v691 = vand.u32 %v690, 4294901760
    %692 = vmatpush.msra.mxu0 %v691
    %v693 = vand.u32 %v64, 4294901760
    %v694 = vsub.f32 %v64, %v693
    %v695 = vand.u32 %v694, 4294901760
    %696 = vmatpush.msra.mxu0 %v695
    %v697 = vand.u32 %v63, 4294901760
    %v698 = vsub.f32 %v63, %v697
    %v699 = vand.u32 %v698, 4294901760
    %700 = vmatpush.msra.mxu0 %v699
    %v701 = vand.u32 %v62, 4294901760
    %v702 = vsub.f32 %v62, %v701
    %v703 = vand.u32 %v702, 4294901760
    %704 = vmatpush.msra.mxu0 %v703
    %v705 = vand.u32 %v61, 4294901760
    %v706 = vsub.f32 %v61, %v705
    %v707 = vand.u32 %v706, 4294901760
    %708 = vmatpush.msra.mxu0 %v707
    %v709 = vand.u32 %v60, 4294901760
    %v710 = vsub.f32 %v60, %v709
    %v711 = vand.u32 %v710, 4294901760
    %712 = vmatpush.msra.mxu0 %v711
    %v713 = vand.u32 %v59, 4294901760
    %v714 = vsub.f32 %v59, %v713
    %v715 = vand.u32 %v714, 4294901760
    %716 = vmatpush.msra.mxu0 %v715
    %v717 = vand.u32 %v417, 4294901760
    %718 = vmatmul.f32.gmra.mxu0 %v717
    %v719 = vpop.f32.mrf.mxu0
    %v720 = vadd.f32 %v651, %v719
    %721 = vdwg.mxu0
    %v722 = vand.u32 %v74, 4294901760
    %723 = vmatpush.msra.mxu0 %v722
    %v724 = vand.u32 %v73, 4294901760
    %725 = vmatpush.msra.mxu0 %v724
    %v726 = vand.u32 %v72, 4294901760
    %727 = vmatpush.msra.mxu0 %v726
    %v728 = vand.u32 %v71, 4294901760
    %729 = vmatpush.msra.mxu0 %v728
    %v730 = vand.u32 %v70, 4294901760
    %731 = vmatpush.msra.mxu0 %v730
    %v732 = vand.u32 %v69, 4294901760
    %733 = vmatpush.msra.mxu0 %v732
    %v734 = vand.u32 %v68, 4294901760
    %735 = vmatpush.msra.mxu0 %v734
    %v736 = vand.u32 %v67, 4294901760
    %737 = vmatpush.msra.mxu0 %v736
    %v738 = vand.u32 %v66, 4294901760
    %739 = vmatpush.msra.mxu0 %v738
    %v740 = vand.u32 %v65, 4294901760
    %741 = vmatpush.msra.mxu0 %v740
    %v742 = vand.u32 %v64, 4294901760
    %743 = vmatpush.msra.mxu0 %v742
    %v744 = vand.u32 %v63, 4294901760
    %745 = vmatpush.msra.mxu0 %v744
    %v746 = vand.u32 %v62, 4294901760
    %747 = vmatpush.msra.mxu0 %v746
    %v748 = vand.u32 %v61, 4294901760
    %749 = vmatpush.msra.mxu0 %v748
    %v750 = vand.u32 %v60, 4294901760
    %751 = vmatpush.msra.mxu0 %v750
    %v752 = vand.u32 %v59, 4294901760
    %753 = vmatpush.msra.mxu0 %v752
    %v754 = vand.u32 %v417, 4294901760
    %755 = vmatmul.f32.gmra.mxu0 %v754
    %v756 = vpop.f32.mrf.mxu0
    %v757 = vadd.f32 %v720, %v756
    %758 = vdwg.mxu0
    %v759 = vrsqrt.pop %v757
    %v760 = vmul.f32 %v759, %v757
    %v761 = vmul.f32 %v760, %v759
    %v762 = vmul.f32 0.5, %v761
    %v763 = vsub.f32 1.5, %v762
    %v764 = vmul.f32 %v759, %v763
    %vm765 = vweird.f32 %v757
    %vm766 = vweird.f32 %v759
    %vm767 = vmor %vm765, %vm766
    %v768 = vsel %vm767, %v759, %v764
    %v769 = vmul.f32 %v416, %v768
    %v770 = vld [vmem:[#allocation5] sm:$0x1]
    %v772 = vperm.slane %v770, 0
    %v774 = vmul.f32 %v769, %v772
    %775 = vst [vmem:[#allocation8] sm:$0xf] %v774
    // Predicated region
    $region26: #{tpu_custom_call.1} parent=1 // pred_check
      _
    $region27: #{tpu_custom_call.1} parent=1 // pred_check_branch
      %777 = sbr.rel (0) target = $region29
    $region28: #{tpu_custom_call.1} parent=1 // pred_region
      %779 = vsyncadd [#allocation4], 0
      %s781 = sshll.u32 [#allocation8], 4
      %s782 = int_to_ptr.vmem [resolvable:$true] %s781
      %s783 = sshll.u32 %s3, 4
      %s784 = int_to_ptr.hbm [resolvable:$true] %s783
      %786 = dma.vmem_to_hbm [thread:$0]  %s782, 64, %s784, [#allocation4]
    $region29: #{tpu_custom_call.1} parent=1 // pred_fallthru
      _
    // Predicated region
    $region30: #{tpu_custom_call.1} parent=1 // pred_check
      _
    $region31: #{tpu_custom_call.1} parent=1 // pred_check_branch
      %788 = sbr.rel (0) target = $region33
    $region32: #{tpu_custom_call.1} parent=1 // pred_region
      %790 = dma.done [#allocation4], 64
    $region33: #{tpu_custom_call.1} parent=1 // pred_fallthru
      _
    %791 = vsyncpa [#allocation3], 1
    %792 = vsyncpa [#allocation6], 1
    %793 = vsyncpa [#allocation4], 1

</llo_original>
